<compile_context>
chip_gen: v7x
topology: tpu7x:2x2x1
jax: 0.10.0
libtpu: 0.0.40
codegen_flags: <defaults>
</compile_context>

<pallas_src>
import functools

import jax
import jax.numpy as jnp
from jax.experimental import pallas as pl
from jax.experimental.pallas import tpu as pltpu


def _head_kernel(a_ref, b_ref, wa_ref, wb_ref, ones_ref, bias_ref, out_ref, *,
                 soft_max: bool):
    # logits = concat([a, b], -1) @ W.T + bias, computed in the lane-packed layout:
    # one full-width MXU op per operand, block-diagonal weight replicas.
    logits = (
        jnp.dot(a_ref[...], wa_ref[...], preferred_element_type=jnp.float32)
        + jnp.dot(b_ref[...], wb_ref[...], preferred_element_type=jnp.float32)
        + bias_ref[...]
    )
    if soft_max:
        # Stabilizer: max over the whole packed (128-lane) row.  It is uniform
        # within every tag-wide lane group, so softmax(x - m) equals the exact
        # per-group softmax (softmax is shift-invariant per group).
        m = jnp.max(logits, axis=-1, keepdims=True)
        e = jnp.exp(logits - m)
        # Segmented (tag-wide lane group) sums via one block-diagonal-ones matmul;
        # each lane receives the sum of its own group, broadcast across the group.
        gsum = jnp.dot(e, ones_ref[...], preferred_element_type=jnp.float32)
        logits = e * pl.reciprocal(gsum)  # exact (non-approx) reciprocal
    out_ref[...] = logits.astype(out_ref.dtype)


def transducer_d_head(first_out, second_out, weight, bias, *, soft_max=True, tm=512):
    """first_out, second_out: (B, T, tagset).  weight: (tagset, 2*tagset) (torch
    Linear layout).  bias: (tagset,).  Returns (B, T, tagset)."""
    B, T, tag = first_out.shape
    rows = B * T

    # Lane-dense packing factor: how many logical rows share one 128-lane row.
    pack = 128 // tag if (tag <= 128 and 128 % tag == 0) else 1

    a2d = first_out.reshape(rows, tag)
    b2d = second_out.reshape(rows, tag)
    pad = (-rows) % pack
    if pad:  # only copies when B*T is not a multiple of `pack`
        a2d = jnp.pad(a2d, ((0, pad), (0, 0)))
        b2d = jnp.pad(b2d, ((0, pad), (0, 0)))
    rows_p = rows + pad
    R = rows_p // pack          # packed rows
    W = pack * tag              # packed width (128 whenever tag divides 128)

    # Contiguous reshapes -> no data movement, fully lane-dense HBM/VMEM tiles.
    a_p = a2d.reshape(R, W)
    b_p = b2d.reshape(R, W)

    # torch: y = x @ W.T + b with x = [a | b]; split W.T into its two halves and
    # replicate each block-diagonally so the packed matmul is exact.
    wt = weight.T.astype(jnp.float32)                    # (2*tag, tag)
    eye_p = jnp.eye(pack, dtype=jnp.float32)
    wa_bd = jnp.kron(eye_p, wt[:tag, :])                 # (W, W)
    wb_bd = jnp.kron(eye_p, wt[tag:, :])                 # (W, W)
    ones_bd = jnp.kron(eye_p, jnp.ones((tag, tag), jnp.float32))  # segmented sum
    bias_p = jnp.tile(bias.astype(jnp.float32), pack).reshape(1, W)

    # Big row tile; either a multiple of 8 (default) or the full packed extent.
    tm = min(tm, R)
    grid = (pl.cdiv(R, tm),)

    kernel = functools.partial(_head_kernel, soft_max=soft_max)
    out_p = pl.pallas_call(
        kernel,
        out_shape=jax.ShapeDtypeStruct((R, W), first_out.dtype),
        grid_spec=pltpu.PrefetchScalarGridSpec(
            num_scalar_prefetch=0,
            grid=grid,
            in_specs=[
                pl.BlockSpec((tm, W), lambda i: (i, 0)),   # packed first_out rows
                pl.BlockSpec((tm, W), lambda i: (i, 0)),   # packed second_out rows
                pl.BlockSpec((W, W), lambda i: (0, 0)),    # block-diag W_a (resident)
                pl.BlockSpec((W, W), lambda i: (0, 0)),    # block-diag W_b (resident)
                pl.BlockSpec((W, W), lambda i: (0, 0)),    # block-diag ones (resident)
                pl.BlockSpec((1, W), lambda i: (0, 0)),    # tiled bias (resident)
            ],
            out_specs=pl.BlockSpec((tm, W), lambda i: (i, 0)),
        ),
        compiler_params=pltpu.CompilerParams(
            dimension_semantics=("parallel",),
        ),
    )(a_p, b_p, wa_bd, wb_bd, ones_bd, bias_p)

    out2d = out_p.reshape(rows_p, tag)
    if pad:
        out2d = out2d[:rows]
    return out2d.reshape(B, T, tag)


if __name__ == "__main__":
    key = jax.random.PRNGKey(0)
    k1, k2, k3, k4 = jax.random.split(key, 4)

    batch, seq, tagset = 2, 8, 16

    # Stand-ins for modelA / modelB outputs (each (B, T, tagset)).
    first_out = jax.random.normal(k1, (batch, seq, tagset), dtype=jnp.float32)
    second_out = jax.random.normal(k2, (batch, seq, tagset), dtype=jnp.float32)

    # hidden_out = nn.Linear(tagset * 2, tagset): weight (tagset, 2*tagset), bias (tagset,)
    bound = 1.0 / jnp.sqrt(2.0 * tagset)
    weight = jax.random.uniform(k3, (tagset, 2 * tagset), jnp.float32, -bound, bound)
    bias = jax.random.uniform(k4, (tagset,), jnp.float32, -bound, bound)

    out = transducer_d_head(first_out, second_out, weight, bias, soft_max=True)
    out = jax.block_until_ready(out)

    # quick sanity check against plain-JAX reference
    ref = jnp.concatenate([first_out, second_out], axis=2) @ weight.T + bias
    ref = jax.nn.softmax(ref, axis=2)
    assert out.shape == (batch, seq, tagset)
    assert jnp.allclose(out, ref, atol=1e-5, rtol=1e-5)

    print("KERNEL_OK")
</pallas_src>

<mosaic_0001>
module attributes {stable_mosaic.version = 11 : i64} {
  func.func @_head_kernel(%arg0: i32, %arg1: memref<2x128xf32, #tpu.memory_space<vmem>>, %arg2: memref<2x128xf32, #tpu.memory_space<vmem>>, %arg3: memref<128x128xf32, #tpu.memory_space<vmem>>, %arg4: memref<128x128xf32, #tpu.memory_space<vmem>>, %arg5: memref<128x128xf32, #tpu.memory_space<vmem>>, %arg6: memref<1x128xf32, #tpu.memory_space<vmem>>, %arg7: memref<2x128xf32, #tpu.memory_space<vmem>>) attributes {dimension_semantics = [#tpu.dimension_semantics<parallel>], iteration_bounds = array<i64: 1>, scalar_prefetch = 0 : i64, scratch_operands = 0 : i64, tpu.core_type = #tpu.core_type<tc>, window_params = [{transform_indices = @transform_0, window_bounds = array<i64: 2, 128>}, {transform_indices = @transform_1, window_bounds = array<i64: 2, 128>}, {pipeline_mode = #tpu.pipeline_mode<synchronous>, transform_indices = @transform_2, window_bounds = array<i64: 128, 128>}, {pipeline_mode = #tpu.pipeline_mode<synchronous>, transform_indices = @transform_3, window_bounds = array<i64: 128, 128>}, {pipeline_mode = #tpu.pipeline_mode<synchronous>, transform_indices = @transform_4, window_bounds = array<i64: 128, 128>}, {pipeline_mode = #tpu.pipeline_mode<synchronous>, transform_indices = @transform_5, window_bounds = array<i64: 1, 128>}, {transform_indices = @transform_6, window_bounds = array<i64: 2, 128>}]} {
    %c0 = arith.constant 0 : index
    %c0_0 = arith.constant 0 : index
    %0 = vector.load %arg1[%c0, %c0_0] : memref<2x128xf32, #tpu.memory_space<vmem>>, vector<2x128xf32>
    %c0_1 = arith.constant 0 : index
    %c0_2 = arith.constant 0 : index
    %1 = vector.load %arg3[%c0_1, %c0_2] : memref<128x128xf32, #tpu.memory_space<vmem>>, vector<128x128xf32>
    %cst = arith.constant dense<0.000000e+00> : vector<2x128xf32>
    %2 = tpu.matmul %0, %1, %cst {dimension_numbers = #tpu.dot_dimension_numbers<[1], [0], [0], [1], [0, 0, 1, 1], [], []>} : vector<2x128xf32>, vector<128x128xf32>, vector<2x128xf32> -> vector<2x128xf32>
    %c0_3 = arith.constant 0 : index
    %c0_4 = arith.constant 0 : index
    %3 = vector.load %arg2[%c0_3, %c0_4] : memref<2x128xf32, #tpu.memory_space<vmem>>, vector<2x128xf32>
    %c0_5 = arith.constant 0 : index
    %c0_6 = arith.constant 0 : index
    %4 = vector.load %arg4[%c0_5, %c0_6] : memref<128x128xf32, #tpu.memory_space<vmem>>, vector<128x128xf32>
    %cst_7 = arith.constant dense<0.000000e+00> : vector<2x128xf32>
    %5 = tpu.matmul %3, %4, %cst_7 {dimension_numbers = #tpu.dot_dimension_numbers<[1], [0], [0], [1], [0, 0, 1, 1], [], []>} : vector<2x128xf32>, vector<128x128xf32>, vector<2x128xf32> -> vector<2x128xf32>
    %6 = arith.addf %2, %5 : vector<2x128xf32>
    %c0_8 = arith.constant 0 : index
    %c0_9 = arith.constant 0 : index
    %7 = vector.load %arg6[%c0_8, %c0_9] : memref<1x128xf32, #tpu.memory_space<vmem>>, vector<1x128xf32>
    %8 = vector.broadcast %7 : vector<1x128xf32> to vector<2x128xf32>
    %9 = arith.addf %6, %8 : vector<2x128xf32>
    %cst_10 = arith.constant dense<0xFF800000> : vector<2xf32>
    %10 = vector.multi_reduction <maximumf>, %9, %cst_10 [1] : vector<2x128xf32> to vector<2xf32>
    %11 = vector.shape_cast %10 : vector<2xf32> to vector<2x1xf32>
    %12 = vector.broadcast %11 : vector<2x1xf32> to vector<2x128xf32>
    %13 = arith.subf %9, %12 : vector<2x128xf32>
    %14 = math.exp %13 : vector<2x128xf32>
    %c0_11 = arith.constant 0 : index
    %c0_12 = arith.constant 0 : index
    %15 = vector.load %arg5[%c0_11, %c0_12] : memref<128x128xf32, #tpu.memory_space<vmem>>, vector<128x128xf32>
    %cst_13 = arith.constant dense<0.000000e+00> : vector<2x128xf32>
    %16 = tpu.matmul %14, %15, %cst_13 {dimension_numbers = #tpu.dot_dimension_numbers<[1], [0], [0], [1], [0, 0, 1, 1], [], []>} : vector<2x128xf32>, vector<128x128xf32>, vector<2x128xf32> -> vector<2x128xf32>
    %17 = tpu.reciprocal %16 : vector<2x128xf32> -> vector<2x128xf32>
    %18 = arith.mulf %14, %17 : vector<2x128xf32>
    %c0_14 = arith.constant 0 : index
    %c0_15 = arith.constant 0 : index
    %19 = vector.load %arg7[%c0_14, %c0_15] : memref<2x128xf32, #tpu.memory_space<vmem>>, vector<2x128xf32>
    tpu.vector_store %arg7[%c0_14, %c0_15], %18 {strides = array<i32>} : memref<2x128xf32, #tpu.memory_space<vmem>>, vector<2x128xf32>,
    return
  }
  func.func @transform_0(%arg0: i32) -> (i32, i32) {
    %c0_i32 = arith.constant 0 : i32
    %c0_i32_0 = arith.constant 0 : i32
    return %arg0, %c0_i32 : i32, i32
  }
  func.func @transform_1(%arg0: i32) -> (i32, i32) {
    %c0_i32 = arith.constant 0 : i32
    %c0_i32_0 = arith.constant 0 : i32
    return %arg0, %c0_i32 : i32, i32
  }
  func.func @transform_2(%arg0: i32) -> (i32, i32) {
    %c0_i32 = arith.constant 0 : i32
    %c0_i32_0 = arith.constant 0 : i32
    %c0_i32_1 = arith.constant 0 : i32
    return %c0_i32, %c0_i32_0 : i32, i32
  }
  func.func @transform_3(%arg0: i32) -> (i32, i32) {
    %c0_i32 = arith.constant 0 : i32
    %c0_i32_0 = arith.constant 0 : i32
    %c0_i32_1 = arith.constant 0 : i32
    return %c0_i32, %c0_i32_0 : i32, i32
  }
  func.func @transform_4(%arg0: i32) -> (i32, i32) {
    %c0_i32 = arith.constant 0 : i32
    %c0_i32_0 = arith.constant 0 : i32
    %c0_i32_1 = arith.constant 0 : i32
    return %c0_i32, %c0_i32_0 : i32, i32
  }
  func.func @transform_5(%arg0: i32) -> (i32, i32) {
    %c0_i32 = arith.constant 0 : i32
    %c0_i32_0 = arith.constant 0 : i32
    %c0_i32_1 = arith.constant 0 : i32
    return %c0_i32, %c0_i32_0 : i32, i32
  }
  func.func @transform_6(%arg0: i32) -> (i32, i32) {
    %c0_i32 = arith.constant 0 : i32
    %c0_i32_0 = arith.constant 0 : i32
    return %arg0, %c0_i32 : i32, i32
  }
}

</mosaic_0001>

<llo_original>
// kernel: tpu_custom_call.1
$region0: #{tpu_custom_call.1}
  #allocation0 [shape = 'u32[]', space=smem, size = 0x4, offset = 0x4, fixed_abs, tag = 'smem constant byte address 0x4 - core index']
  #allocation1 [shape = 'u32[144,128]{1,0:T(1,128)}', space=vmem, size = 0x12000, scoped, tag = 'internal scratch']
  %s0 = inlined_call_operand.hbm [shape: f32[2,128], index: 0, kind: input, shape index: {}]
  %s1 = inlined_call_operand.vmem [shape: f32[2,128], index: 1, kind: input, shape index: {}]
  %s2 = inlined_call_operand.hbm [shape: f32[128,128], index: 2, kind: input, shape index: {}]
  %s3 = inlined_call_operand.hbm [shape: f32[128,128], index: 3, kind: input, shape index: {}]
  %s4 = inlined_call_operand.hbm [shape: f32[128,128], index: 4, kind: input, shape index: {}]
  %s5 = inlined_call_operand.vmem [shape: f32[1,128], index: 5, kind: input, shape index: {}]
  %s6 = inlined_call_operand.hbm [shape: f32[2,128], index: 6, kind: output, shape index: {}]
  %s7 = sld [smem:[#allocation0]]
  $region50: #{tpu_custom_call.1} parent=0
    _
  %s9 = ssub.s32 1, %s7
  %s10 = scalar_select 0, %s9, %s7
  $region1: #{tpu_custom_call.1} parent=0
    #allocation2 [shape = 'u8[1024]{0}', space=vmem, size = 0x400, scoped, tag = 'input window, operand 0, single buffered']
    #allocation3 [shape = 's32[1]{0}', space=sflag, size = 0x4, scoped, tag = 'scoped memory for tpu_custom_call.1']
    #allocation4 [shape = 's32[1]{0}', space=sflag, size = 0x4, scoped, tag = 'scoped memory for tpu_custom_call.1']
    #allocation5 [shape = 'u8[65536]{0}', space=vmem, size = 0x10000, scoped, tag = 'input window, operand 2, single buffered']
    #allocation6 [shape = 's32[1]{0}', space=sflag, size = 0x4, scoped, tag = 'scoped memory for tpu_custom_call.1']
    #allocation7 [shape = 'u8[65536]{0}', space=vmem, size = 0x10000, scoped, tag = 'input window, operand 3, single buffered']
    #allocation8 [shape = 'u8[65536]{0}', space=vmem, size = 0x10000, scoped, tag = 'input window, operand 4, single buffered']
    #allocation9 [shape = 's32[1]{0}', space=sflag, size = 0x4, scoped, tag = 'scoped memory for tpu_custom_call.1']
    #allocation10 [shape = 'u8[1024]{0}', space=vmem, size = 0x400, scoped, tag = 'output window, operand 0, single buffered']
    %11 = vsyncpa [#allocation3], 0
    %12 = vsyncpa [#allocation6], 0
    %13 = vsyncpa [#allocation9], 0
    %14 = vsyncpa [#allocation4], 0
    // Predicated region
    $region2: #{tpu_custom_call.1} parent=1 // pred_check
      _
    $region3: #{tpu_custom_call.1} parent=1 // pred_check_branch
      %16 = sbr.rel (0) target = $region5
    $region4: #{tpu_custom_call.1} parent=1 // pred_region
      %s18 = ssub.s32 32, 32
      %19 = vsyncadd [#allocation3], %s18
      %s21 = sshll.u32 [#allocation2], 4
      %s22 = int_to_ptr.vmem [resolvable:$true] %s21
      %24 = dma.hbm_to_vmem [thread:$0]  %s0, 32, %s22, [#allocation3]
    $region5: #{tpu_custom_call.1} parent=1 // pred_fallthru
      _
    // Predicated region
    $region6: #{tpu_custom_call.1} parent=1 // pred_check
      _
    $region7: #{tpu_custom_call.1} parent=1 // pred_check_branch
      %26 = sbr.rel (0) target = $region9
    $region8: #{tpu_custom_call.1} parent=1 // pred_region
      _
    $region9: #{tpu_custom_call.1} parent=1 // pred_fallthru
      _
    // Predicated region
    $region10: #{tpu_custom_call.1} parent=1 // pred_check
      _
    $region11: #{tpu_custom_call.1} parent=1 // pred_check_branch
      %28 = sbr.rel (0) target = $region13
    $region12: #{tpu_custom_call.1} parent=1 // pred_region
      %s30 = ssub.s32 2048, 2048
      %31 = vsyncadd [#allocation6], %s30
      %s32 = sshll.u32 [#allocation5], 4
      %s33 = int_to_ptr.vmem [resolvable:$true] %s32
      %38 = dma.hbm_to_vmem [thread:$0]  %s2, 2048, %s33, [#allocation6], 128, 128, 8
    $region13: #{tpu_custom_call.1} parent=1 // pred_fallthru
      _
    // Predicated region
    $region14: #{tpu_custom_call.1} parent=1 // pred_check
      _
    $region15: #{tpu_custom_call.1} parent=1 // pred_check_branch
      %40 = sbr.rel (0) target = $region17
    $region16: #{tpu_custom_call.1} parent=1 // pred_region
      %s42 = ssub.s32 2048, 2048
      %43 = vsyncadd [#allocation6], %s42
      %s44 = sshll.u32 [#allocation7], 4
      %s45 = int_to_ptr.vmem [resolvable:$true] %s44
      %50 = dma.hbm_to_vmem [thread:$0]  %s3, 2048, %s45, [#allocation6], 128, 128, 8
    $region17: #{tpu_custom_call.1} parent=1 // pred_fallthru
      _
    // Predicated region
    $region18: #{tpu_custom_call.1} parent=1 // pred_check
      _
    $region19: #{tpu_custom_call.1} parent=1 // pred_check_branch
      %52 = sbr.rel (0) target = $region21
    $region20: #{tpu_custom_call.1} parent=1 // pred_region
      %s54 = ssub.s32 2048, 2048
      %55 = vsyncadd [#allocation9], %s54
      %s56 = sshll.u32 [#allocation8], 4
      %s57 = int_to_ptr.vmem [resolvable:$true] %s56
      %62 = dma.hbm_to_vmem [thread:$0]  %s4, 2048, %s57, [#allocation9], 128, 128, 8
    $region21: #{tpu_custom_call.1} parent=1 // pred_fallthru
      _
    // Predicated region
    $region22: #{tpu_custom_call.1} parent=1 // pred_check
      _
    $region23: #{tpu_custom_call.1} parent=1 // pred_check_branch
      %64 = sbr.rel (0) target = $region25
    $region24: #{tpu_custom_call.1} parent=1 // pred_region
      _
    $region25: #{tpu_custom_call.1} parent=1 // pred_fallthru
      _
    // Predicated region
    $region26: #{tpu_custom_call.1} parent=1 // pred_check
      _
    $region27: #{tpu_custom_call.1} parent=1 // pred_check_branch
      %66 = sbr.rel (0) target = $region29
    $region28: #{tpu_custom_call.1} parent=1 // pred_region
      %67 = dma.done [#allocation3], 32
    $region29: #{tpu_custom_call.1} parent=1 // pred_fallthru
      _
    // Predicated region
    $region30: #{tpu_custom_call.1} parent=1 // pred_check
      _
    $region31: #{tpu_custom_call.1} parent=1 // pred_check_branch
      %69 = sbr.rel (0) target = $region33
    $region32: #{tpu_custom_call.1} parent=1 // pred_region
      %70 = dma.done [#allocation6], 2048
    $region33: #{tpu_custom_call.1} parent=1 // pred_fallthru
      _
    // Predicated region
    $region34: #{tpu_custom_call.1} parent=1 // pred_check
      _
    $region35: #{tpu_custom_call.1} parent=1 // pred_check_branch
      %72 = sbr.rel (0) target = $region37
    $region36: #{tpu_custom_call.1} parent=1 // pred_region
      %73 = dma.done [#allocation6], 2048
    $region37: #{tpu_custom_call.1} parent=1 // pred_fallthru
      _
    // Predicated region
    $region38: #{tpu_custom_call.1} parent=1 // pred_check
      _
    $region39: #{tpu_custom_call.1} parent=1 // pred_check_branch
      %75 = sbr.rel (0) target = $region41
    $region40: #{tpu_custom_call.1} parent=1 // pred_region
      %76 = dma.done [#allocation9], 2048
    $region41: #{tpu_custom_call.1} parent=1 // pred_fallthru
      _
    %v77 = vld [vmem:[#allocation2] sm:$0x3]
    %v78 = vld [vmem:[#allocation5] sm:$0xff]
    %v79 = vld [vmem:[#allocation5 + $0x8] sm:$0xff]
    %v80 = vld [vmem:[#allocation5 + $0x10] sm:$0xff]
    %v81 = vld [vmem:[#allocation5 + $0x18] sm:$0xff]
    %v82 = vld [vmem:[#allocation5 + $0x20] sm:$0xff]
    %v83 = vld [vmem:[#allocation5 + $0x28] sm:$0xff]
    %v84 = vld [vmem:[#allocation5 + $0x30] sm:$0xff]
    %v85 = vld [vmem:[#allocation5 + $0x38] sm:$0xff]
    %v86 = vld [vmem:[#allocation5 + $0x40] sm:$0xff]
    %v87 = vld [vmem:[#allocation5 + $0x48] sm:$0xff]
    %v88 = vld [vmem:[#allocation5 + $0x50] sm:$0xff]
    %v89 = vld [vmem:[#allocation5 + $0x58] sm:$0xff]
    %v90 = vld [vmem:[#allocation5 + $0x60] sm:$0xff]
    %v91 = vld [vmem:[#allocation5 + $0x68] sm:$0xff]
    %v92 = vld [vmem:[#allocation5 + $0x70] sm:$0xff]
    %v93 = vld [vmem:[#allocation5 + $0x78] sm:$0xff]
    %v94 = vld [vmem:[%s1] sm:$0x3]
    %v95 = vld [vmem:[#allocation7] sm:$0xff]
    %v96 = vld [vmem:[#allocation7 + $0x8] sm:$0xff]
    %v97 = vld [vmem:[#allocation7 + $0x10] sm:$0xff]
    %v98 = vld [vmem:[#allocation7 + $0x18] sm:$0xff]
    %v99 = vld [vmem:[#allocation7 + $0x20] sm:$0xff]
    %v100 = vld [vmem:[#allocation7 + $0x28] sm:$0xff]
    %v101 = vld [vmem:[#allocation7 + $0x30] sm:$0xff]
    %v102 = vld [vmem:[#allocation7 + $0x38] sm:$0xff]
    %v103 = vld [vmem:[#allocation7 + $0x40] sm:$0xff]
    %v104 = vld [vmem:[#allocation7 + $0x48] sm:$0xff]
    %v105 = vld [vmem:[#allocation7 + $0x50] sm:$0xff]
    %v106 = vld [vmem:[#allocation7 + $0x58] sm:$0xff]
    %v107 = vld [vmem:[#allocation7 + $0x60] sm:$0xff]
    %v108 = vld [vmem:[#allocation7 + $0x68] sm:$0xff]
    %v109 = vld [vmem:[#allocation7 + $0x70] sm:$0xff]
    %v110 = vld [vmem:[#allocation7 + $0x78] sm:$0xff]
    %111 = vmatprep.subr.mxu0 0.0
    %112 = vmatpush1.msra.mxu0 %v95
    %113 = vmatprep.subr.mxu0 0.0
    %114 = vmatpush1.msra.mxu0 %v96
    %115 = vmatprep.subr.mxu0 0.0
    %116 = vmatpush1.msra.mxu0 %v97
    %117 = vmatprep.subr.mxu0 0.0
    %118 = vmatpush1.msra.mxu0 %v98
    %119 = vmatprep.subr.mxu0 0.0
    %120 = vmatpush1.msra.mxu0 %v99
    %121 = vmatprep.subr.mxu0 0.0
    %122 = vmatpush1.msra.mxu0 %v100
    %123 = vmatprep.subr.mxu0 0.0
    %124 = vmatpush1.msra.mxu0 %v101
    %125 = vmatprep.subr.mxu0 0.0
    %126 = vmatpush1.msra.mxu0 %v102
    %127 = vmatprep.subr.mxu0 0.0
    %128 = vmatpush1.msra.mxu0 %v103
    %129 = vmatprep.subr.mxu0 0.0
    %130 = vmatpush1.msra.mxu0 %v104
    %131 = vmatprep.subr.mxu0 0.0
    %132 = vmatpush1.msra.mxu0 %v105
    %133 = vmatprep.subr.mxu0 0.0
    %134 = vmatpush1.msra.mxu0 %v106
    %135 = vmatprep.subr.mxu0 0.0
    %136 = vmatpush1.msra.mxu0 %v107
    %137 = vmatprep.subr.mxu0 0.0
    %138 = vmatpush1.msra.mxu0 %v108
    %139 = vmatprep.subr.mxu0 0.0
    %140 = vmatpush1.msra.mxu0 %v109
    %141 = vmatprep.subr.mxu0 0.0
    %142 = vmatpush1.msra.mxu0 %v110
    %143 = vmatprep.subr.mxu0 0.0
    %144 = vmatpush1.msra.mxu0 0.0
    %145 = vmatprep.subr.mxu0 0.0
    %146 = vmatpush1.msra.mxu0 0.0
    %147 = vmatprep.subr.mxu0 0.0
    %148 = vmatpush1.msra.mxu0 0.0
    %149 = vmatprep.subr.mxu0 0.0
    %150 = vmatpush1.msra.mxu0 0.0
    %151 = vmatprep.subr.mxu0 0.0
    %152 = vmatpush1.msra.mxu0 0.0
    %153 = vmatprep.subr.mxu0 0.0
    %154 = vmatpush1.msra.mxu0 0.0
    %155 = vmatprep.subr.mxu0 0.0
    %156 = vmatpush1.msra.mxu0 0.0
    %157 = vmatprep.subr.mxu0 0.0
    %158 = vmatpush1.msra.mxu0 0.0
    %159 = vmatprep.subr.mxu0 0.0
    %160 = vmatpush1.msra.mxu0 0.0
    %161 = vmatprep.subr.mxu0 0.0
    %162 = vmatpush1.msra.mxu0 0.0
    %163 = vmatprep.subr.mxu0 0.0
    %164 = vmatpush1.msra.mxu0 0.0
    %165 = vmatprep.subr.mxu0 0.0
    %166 = vmatpush1.msra.mxu0 0.0
    %167 = vmatprep.subr.mxu0 0.0
    %168 = vmatpush1.msra.mxu0 0.0
    %169 = vmatprep.subr.mxu0 0.0
    %170 = vmatpush1.msra.mxu0 0.0
    %171 = vmatprep.subr.mxu0 0.0
    %172 = vmatpush1.msra.mxu0 0.0
    %173 = vmatprep.subr.mxu0 0.0
    %174 = vmatpush1.msra.mxu0 0.0
    %175 = vmatprep.mubr.f32.mxu0 0.0
    %176 = vmatmul.mubr.f32.gmra.mrb[0].mxu0 %v94
    %v177 = vpop.f32.mrb[0].mxu0
    %v178 = vadd.f32 0.0, %v177
    %v179 = vpop.f32.mrb[0].mxu0
    %180 = vdwg.mxu0
    %181 = vmatprep.subr.mxu0 0.0
    %182 = vmatpush1.msra.mxu0 %v78
    %183 = vmatprep.subr.mxu0 0.0
    %184 = vmatpush1.msra.mxu0 %v79
    %185 = vmatprep.subr.mxu0 0.0
    %186 = vmatpush1.msra.mxu0 %v80
    %187 = vmatprep.subr.mxu0 0.0
    %188 = vmatpush1.msra.mxu0 %v81
    %189 = vmatprep.subr.mxu0 0.0
    %190 = vmatpush1.msra.mxu0 %v82
    %191 = vmatprep.subr.mxu0 0.0
    %192 = vmatpush1.msra.mxu0 %v83
    %193 = vmatprep.subr.mxu0 0.0
    %194 = vmatpush1.msra.mxu0 %v84
    %195 = vmatprep.subr.mxu0 0.0
    %196 = vmatpush1.msra.mxu0 %v85
    %197 = vmatprep.subr.mxu0 0.0
    %198 = vmatpush1.msra.mxu0 %v86
    %199 = vmatprep.subr.mxu0 0.0
    %200 = vmatpush1.msra.mxu0 %v87
    %201 = vmatprep.subr.mxu0 0.0
    %202 = vmatpush1.msra.mxu0 %v88
    %203 = vmatprep.subr.mxu0 0.0
    %204 = vmatpush1.msra.mxu0 %v89
    %205 = vmatprep.subr.mxu0 0.0
    %206 = vmatpush1.msra.mxu0 %v90
    %207 = vmatprep.subr.mxu0 0.0
    %208 = vmatpush1.msra.mxu0 %v91
    %209 = vmatprep.subr.mxu0 0.0
    %210 = vmatpush1.msra.mxu0 %v92
    %211 = vmatprep.subr.mxu0 0.0
    %212 = vmatpush1.msra.mxu0 %v93
    %213 = vmatprep.subr.mxu0 0.0
    %214 = vmatpush1.msra.mxu0 0.0
    %215 = vmatprep.subr.mxu0 0.0
    %216 = vmatpush1.msra.mxu0 0.0
    %217 = vmatprep.subr.mxu0 0.0
    %218 = vmatpush1.msra.mxu0 0.0
    %219 = vmatprep.subr.mxu0 0.0
    %220 = vmatpush1.msra.mxu0 0.0
    %221 = vmatprep.subr.mxu0 0.0
    %222 = vmatpush1.msra.mxu0 0.0
    %223 = vmatprep.subr.mxu0 0.0
    %224 = vmatpush1.msra.mxu0 0.0
    %225 = vmatprep.subr.mxu0 0.0
    %226 = vmatpush1.msra.mxu0 0.0
    %227 = vmatprep.subr.mxu0 0.0
    %228 = vmatpush1.msra.mxu0 0.0
    %229 = vmatprep.subr.mxu0 0.0
    %230 = vmatpush1.msra.mxu0 0.0
    %231 = vmatprep.subr.mxu0 0.0
    %232 = vmatpush1.msra.mxu0 0.0
    %233 = vmatprep.subr.mxu0 0.0
    %234 = vmatpush1.msra.mxu0 0.0
    %235 = vmatprep.subr.mxu0 0.0
    %236 = vmatpush1.msra.mxu0 0.0
    %237 = vmatprep.subr.mxu0 0.0
    %238 = vmatpush1.msra.mxu0 0.0
    %239 = vmatprep.subr.mxu0 0.0
    %240 = vmatpush1.msra.mxu0 0.0
    %241 = vmatprep.subr.mxu0 0.0
    %242 = vmatpush1.msra.mxu0 0.0
    %243 = vmatprep.subr.mxu0 0.0
    %244 = vmatpush1.msra.mxu0 0.0
    %245 = vmatprep.mubr.f32.mxu0 0.0
    %246 = vmatmul.mubr.f32.gmra.mrb[0].mxu0 %v77
    %v247 = vpop.f32.mrb[0].mxu0
    %v248 = vadd.f32 %v178, %v247
    %v249 = vpop.f32.mrb[0].mxu0
    %250 = vdwg.mxu0
    %v251 = vld [vmem:[%s5] sm:$0x1]
    %v253 = vlaneseq
    %v254 = vshrl.u32 %v253, 7
    %v255 = vsub.s32 0, %v254
    %v256 = vrot.slane %v251, %v255
    %v258 = vadd.f32 %v248, %v256
    %vm259 = vcmask 1041408
    %v260 = vsel %vm259, %v258, -inf
    %261 = vmax.xlane.f32.xlu0 %v260
    %v262 = vpop.xlane.xlu0 %261
    %v263 = vsub.f32 %v258, %v262
    %v264 = vmul.f32 %v263, 1.442695
    %v265 = vpow.pop %v264
    %v266 = vld [vmem:[#allocation8] sm:$0xff]
    %v267 = vld [vmem:[#allocation8 + $0x8] sm:$0xff]
    %v268 = vld [vmem:[#allocation8 + $0x10] sm:$0xff]
    %v269 = vld [vmem:[#allocation8 + $0x18] sm:$0xff]
    %v270 = vld [vmem:[#allocation8 + $0x20] sm:$0xff]
    %v271 = vld [vmem:[#allocation8 + $0x28] sm:$0xff]
    %v272 = vld [vmem:[#allocation8 + $0x30] sm:$0xff]
    %v273 = vld [vmem:[#allocation8 + $0x38] sm:$0xff]
    %v274 = vld [vmem:[#allocation8 + $0x40] sm:$0xff]
    %v275 = vld [vmem:[#allocation8 + $0x48] sm:$0xff]
    %v276 = vld [vmem:[#allocation8 + $0x50] sm:$0xff]
    %v277 = vld [vmem:[#allocation8 + $0x58] sm:$0xff]
    %v278 = vld [vmem:[#allocation8 + $0x60] sm:$0xff]
    %v279 = vld [vmem:[#allocation8 + $0x68] sm:$0xff]
    %v280 = vld [vmem:[#allocation8 + $0x70] sm:$0xff]
    %v281 = vld [vmem:[#allocation8 + $0x78] sm:$0xff]
    %282 = vmatprep.subr.mxu0 0.0
    %283 = vmatpush1.msra.mxu0 %v266
    %284 = vmatprep.subr.mxu0 0.0
    %285 = vmatpush1.msra.mxu0 %v267
    %286 = vmatprep.subr.mxu0 0.0
    %287 = vmatpush1.msra.mxu0 %v268
    %288 = vmatprep.subr.mxu0 0.0
    %289 = vmatpush1.msra.mxu0 %v269
    %290 = vmatprep.subr.mxu0 0.0
    %291 = vmatpush1.msra.mxu0 %v270
    %292 = vmatprep.subr.mxu0 0.0
    %293 = vmatpush1.msra.mxu0 %v271
    %294 = vmatprep.subr.mxu0 0.0
    %295 = vmatpush1.msra.mxu0 %v272
    %296 = vmatprep.subr.mxu0 0.0
    %297 = vmatpush1.msra.mxu0 %v273
    %298 = vmatprep.subr.mxu0 0.0
    %299 = vmatpush1.msra.mxu0 %v274
    %300 = vmatprep.subr.mxu0 0.0
    %301 = vmatpush1.msra.mxu0 %v275
    %302 = vmatprep.subr.mxu0 0.0
    %303 = vmatpush1.msra.mxu0 %v276
    %304 = vmatprep.subr.mxu0 0.0
    %305 = vmatpush1.msra.mxu0 %v277
    %306 = vmatprep.subr.mxu0 0.0
    %307 = vmatpush1.msra.mxu0 %v278
    %308 = vmatprep.subr.mxu0 0.0
    %309 = vmatpush1.msra.mxu0 %v279
    %310 = vmatprep.subr.mxu0 0.0
    %311 = vmatpush1.msra.mxu0 %v280
    %312 = vmatprep.subr.mxu0 0.0
    %313 = vmatpush1.msra.mxu0 %v281
    %314 = vmatprep.subr.mxu0 0.0
    %315 = vmatpush1.msra.mxu0 0.0
    %316 = vmatprep.subr.mxu0 0.0
    %317 = vmatpush1.msra.mxu0 0.0
    %318 = vmatprep.subr.mxu0 0.0
    %319 = vmatpush1.msra.mxu0 0.0
    %320 = vmatprep.subr.mxu0 0.0
    %321 = vmatpush1.msra.mxu0 0.0
    %322 = vmatprep.subr.mxu0 0.0
    %323 = vmatpush1.msra.mxu0 0.0
    %324 = vmatprep.subr.mxu0 0.0
    %325 = vmatpush1.msra.mxu0 0.0
    %326 = vmatprep.subr.mxu0 0.0
    %327 = vmatpush1.msra.mxu0 0.0
    %328 = vmatprep.subr.mxu0 0.0
    %329 = vmatpush1.msra.mxu0 0.0
    %330 = vmatprep.subr.mxu0 0.0
    %331 = vmatpush1.msra.mxu0 0.0
    %332 = vmatprep.subr.mxu0 0.0
    %333 = vmatpush1.msra.mxu0 0.0
    %334 = vmatprep.subr.mxu0 0.0
    %335 = vmatpush1.msra.mxu0 0.0
    %336 = vmatprep.subr.mxu0 0.0
    %337 = vmatpush1.msra.mxu0 0.0
    %338 = vmatprep.subr.mxu0 0.0
    %339 = vmatpush1.msra.mxu0 0.0
    %340 = vmatprep.subr.mxu0 0.0
    %341 = vmatpush1.msra.mxu0 0.0
    %342 = vmatprep.subr.mxu0 0.0
    %343 = vmatpush1.msra.mxu0 0.0
    %344 = vmatprep.subr.mxu0 0.0
    %345 = vmatpush1.msra.mxu0 0.0
    %346 = vmatprep.mubr.f32.mxu0 0.0
    %347 = vmatmul.mubr.f32.gmra.mrb[0].mxu0 %v265
    %v348 = vpop.f32.mrb[0].mxu0
    %v349 = vadd.f32 0.0, %v348
    %v350 = vpop.f32.mrb[0].mxu0
    %351 = vdwg.mxu0
    %v352 = vrcp.pop %v349
    %v353 = vmul.f32 %v265, %v352
    %354 = vst [vmem:[#allocation10] sm:$0x3] %v353
    // Predicated region
    $region42: #{tpu_custom_call.1} parent=1 // pred_check
      _
    $region43: #{tpu_custom_call.1} parent=1 // pred_check_branch
      %356 = sbr.rel (0) target = $region45
    $region44: #{tpu_custom_call.1} parent=1 // pred_region
      %s358 = ssub.s32 32, 32
      %359 = vsyncadd [#allocation4], %s358
      %s361 = sshll.u32 [#allocation10], 4
      %s362 = int_to_ptr.vmem [resolvable:$true] %s361
      %364 = dma.vmem_to_hbm [thread:$0]  %s362, 32, %s6, [#allocation4]
    $region45: #{tpu_custom_call.1} parent=1 // pred_fallthru
      _
    // Predicated region
    $region46: #{tpu_custom_call.1} parent=1 // pred_check
      _
    $region47: #{tpu_custom_call.1} parent=1 // pred_check_branch
      %366 = sbr.rel (0) target = $region49
    $region48: #{tpu_custom_call.1} parent=1 // pred_region
      %367 = dma.done [#allocation4], 32
    $region49: #{tpu_custom_call.1} parent=1 // pred_fallthru
      _
    %368 = vsyncpa [#allocation3], 1
    %369 = vsyncpa [#allocation6], 1
    %370 = vsyncpa [#allocation9], 1
    %371 = vsyncpa [#allocation4], 1

</llo_original>
